<compile_context>
chip_gen: v5e
topology: v5e:2x2
jax: 0.10.0
libtpu: 0.0.40
codegen_flags: <defaults>
</compile_context>

<pallas_src>
import math

import numpy as np
import jax
import jax.numpy as jnp
from jax.experimental import pallas as pl
from jax.experimental.pallas import tpu as pltpu

_MU = [1.0, 0.9, 0.7, 0.5, 0.3, 0.1, -0.1, -0.3, -0.5, -0.7, -0.9]
_SIGMA = [0.001] + [0.1] * 10
N_BINS = len(_MU)            # 11
K_PAD = 128                  # lane-padded bin axis for one lane-dense store

# --- compile-time constants for the shared-sigma recurrence -----------------
_BIN0_COEF = -0.5 / (_SIGMA[0] ** 2)     # sigma = 0.001 bin: direct exp
_COEF = -0.5 / (_SIGMA[1] ** 2)          # shared sigma = 0.1 family (-50)
_STEP = 0.2                               # uniform mu spacing in that family
_ANCHOR_IDX = 5                           # mu = +0.1 (central: walk outward)
_ANCHOR_MU = _MU[_ANCHOR_IDX]
_RATIO_UP = -2.0 * _COEF * _STEP          # r_up = exp(+20*m)
_RATIO_DN = 2.0 * _COEF * _STEP           # r_dn = exp(-20*m)


def _chain(direction):
    """(target_bin, compile-time scalar) pairs for walking the sigma=0.1 family
    outward from the anchor:  E_next = E_cur * exp(ratio*m) * scalar."""
    out, src = [], _ANCHOR_IDX
    rng = (range(_ANCHOR_IDX - 1, 0, -1) if direction > 0
           else range(_ANCHOR_IDX + 1, N_BINS))
    for tgt in rng:
        delta = direction * _STEP
        out.append((tgt, math.exp(_COEF * delta * (2.0 * _MU[src] + delta))))
        src = tgt
    return out


_UP_CHAIN = _chain(+1)   # bins 4,3,2,1  (mu = 0.3, 0.5, 0.7, 0.9)
_DN_CHAIN = _chain(-1)   # bins 6..10    (mu = -0.1 ... -0.9)


def _kernel_pooling_kernel(mat_ref, mrow_ref, mcol_ref, out_ref):
    # mat_ref : (TB, R, C)     VMEM
    # mrow_ref: (TB, R, 1)     VMEM   (mask_row * 0.01, pre-scaled on host)
    # mcol_ref: (TB, 1, C)     VMEM
    # out_ref : (1, TB, K_PAD) VMEM
    TB = mat_ref.shape[0]
    mcol = mcol_ref[...]                    # (TB, 1, C)
    mrow = mrow_ref[...]                    # (TB, R, 1)

    # Masked columns: substitute m with the anchor mu (keeps every exp argument
    # small/finite), then fold mask_col once into the anchor / bin-0 value.
    # This replaces the old per-bin `ev * mcol` (11 full-size VPU multiplies).
    m = jnp.where(mcol > 0.0, mat_ref[...], _ANCHOR_MU)   # (TB, R, C)

    def bin_out(ev):
        # column-sum -> clamp/log -> row-mask (incl. 0.01) -> row-sum.
        # TODO(synk): for very large C the XLU lane-reduce could be moved to an
        # otherwise-idle MXU matvec (dot with a ones vector, precision=HIGHEST).
        s = jnp.sum(ev, axis=-1, keepdims=True)            # (TB, R, 1)
        lps = jnp.log(jnp.maximum(s, 1e-10)) * mrow        # (TB, R, 1)
        return jnp.sum(lps, axis=1)                        # (TB, 1)

    outs = [None] * N_BINS

    # Bin 0 (sigma = 0.001, mu = 1.0): its own exp; mcol folded in exactly.
    d0 = m - _MU[0]
    outs[0] = bin_out(jnp.exp(_BIN0_COEF * (d0 * d0)) * mcol)

    # Bins 1..10 (shared sigma = 0.1) via the multiplicative recurrence.
    mc = jnp.clip(m, -4.0, 4.0)             # keep exp(+/-20*m) finite
    da = mc - _ANCHOR_MU
    anchor = jnp.exp(_COEF * (da * da)) * mcol              # zeroes whole chain
    outs[_ANCHOR_IDX] = bin_out(anchor)                     # at masked columns

    r_up = jnp.exp(_RATIO_UP * mc)          # exp(+20*m)
    e = anchor
    for tgt, c in _UP_CHAIN:
        e = e * r_up * c                    # two VPU muls instead of one exp
        outs[tgt] = bin_out(e)

    r_dn = jnp.exp(_RATIO_DN * mc)          # exp(-20*m)
    e = anchor
    for tgt, c in _DN_CHAIN:
        e = e * r_dn * c
        outs[tgt] = bin_out(e)

    # Assemble the 11 per-bin (TB,1) results into one lane-dense (TB,128) tile
    # in registers and write it with a single unmasked vector store (no scratch,
    # no zero-init, no per-bin single-lane masked stores).
    lane = jax.lax.broadcasted_iota(jnp.int32, (TB, K_PAD), 1)
    acc = jnp.zeros((TB, K_PAD), jnp.float32)
    for k in range(N_BINS):
        acc = acc + jnp.where(lane == k, outs[k], 0.0)
    out_ref[0] = acc


def _pick_tb(B, R, C):
    """Batches per grid step.

    Budget the double-buffered input tile PLUS the ~6 live (TB,R,C) f32
    temporaries the recurrence keeps in VMEM; stay well under the 32 MiB scoped
    limit (safe on v5e/v6e 128 MiB and v7x 64 MiB physical VMEM).  Pick a
    divisor of B (no jnp.pad HBM copy, no wasted tail compute) and keep at
    least 2 grid steps so both v7x TensorCores get work.
    """
    per_batch = (2 + 6) * R * C * 4 + 2 * (R + C) * 4 + K_PAD * 4
    budget = 12 * 1024 * 1024
    cap = max(1, budget // max(1, per_batch))
    cap = min(cap, 256)                 # v6e could go higher; 256 already
                                        # amortizes the ~0.35us/step overhead
    if B > 1:
        cap = min(cap, -(-B // 2))      # >= 2 grid steps for v7x's 2 TCs
    cap = max(1, min(cap, B))
    for d in range(cap, 0, -1):         # largest divisor of B <= cap
        if B % d == 0:
            return d
    return 1


def conv_kernel_pooling(matrix, mask_row, mask_col):
    """matrix: (B,R,C), mask_row: (B,R), mask_col: (B,C) -> (B, N_BINS) f32."""
    B, R, C = matrix.shape
    # TODO(synk): carry matrix in bf16 through HBM (upcast before the exps) if
    # input-quantization error is acceptable; kernel is EUP-bound so skipped.
    matrix = matrix.astype(jnp.float32)
    mrow3 = (mask_row.astype(jnp.float32) * 0.01).reshape(B, R, 1)  # fold 0.01
    mcol3 = mask_col.astype(jnp.float32).reshape(B, 1, C)

    tb = _pick_tb(B, R, C)
    nblk = B // tb

    # TODO(synk): add a C-tiling grid axis (with cross-tile partial-sum carry
    # before the log) if a single (R, C) slab ever exceeds the VMEM budget.
    out = pl.pallas_call(
        _kernel_pooling_kernel,
        out_shape=jax.ShapeDtypeStruct((nblk, tb, K_PAD), jnp.float32),
        grid_spec=pltpu.PrefetchScalarGridSpec(
            num_scalar_prefetch=0,
            grid=(nblk,),
            in_specs=[
                pl.BlockSpec((tb, R, C), lambda b: (b, 0, 0)),   # matrix
                pl.BlockSpec((tb, R, 1), lambda b: (b, 0, 0)),   # mask_row*0.01
                pl.BlockSpec((tb, 1, C), lambda b: (b, 0, 0)),   # mask_col
            ],
            out_specs=pl.BlockSpec((1, tb, K_PAD), lambda b: (b, 0, 0)),
        ),
        compiler_params=pltpu.CompilerParams(
            dimension_semantics=("parallel",),        # batch axis independent
            vmem_limit_bytes=32 * 1024 * 1024,
        ),
    )(matrix, mrow3, mcol3)

    return out.reshape(B, K_PAD)[:, :N_BINS]


def _reference(matrix, mask_row, mask_col):
    mu = jnp.asarray(_MU, jnp.float32).reshape(1, 1, 1, N_BINS)
    sigma = jnp.asarray(_SIGMA, jnp.float32).reshape(1, 1, 1, N_BINS)
    m = matrix[..., None]                                            # (B,R,C,1)
    pv = jnp.exp(-(m - mu) ** 2 / sigma ** 2 / 2.0) \
        * mask_col[:, None, :, None]                                 # (B,R,C,K)
    ps = jnp.sum(pv, axis=-2)                                        # (B,R,K)
    lps = jnp.log(jnp.maximum(ps, 1e-10)) * 0.01 * mask_row[..., None]
    return jnp.sum(lps, axis=-2)                                     # (B,K)


if __name__ == "__main__":
    # NOTE: the module's nn.Linear(n_bins, 1) is never applied in forward(),
    # so no parameters are needed here.
    key = jax.random.PRNGKey(0)
    for (B, R, C) in [(2, 8, 16), (4, 16, 128)]:
        key, k1, k2, k3 = jax.random.split(key, 4)
        matrix = jax.random.uniform(k1, (B, R, C), jnp.float32,
                                    minval=-1.0, maxval=1.0)
        mask_row = (jax.random.uniform(k2, (B, R)) > 0.2).astype(jnp.float32)
        mask_col = (jax.random.uniform(k3, (B, C)) > 0.2).astype(jnp.float32)

        out = jax.block_until_ready(conv_kernel_pooling(matrix, mask_row, mask_col))
        ref = _reference(matrix, mask_row, mask_col)
        # Slightly wider atol than the naive formulation: the shared-sigma
        # recurrence reconstructs bins 1..10 to a few 1e-6 relative error.
        np.testing.assert_allclose(np.asarray(out), np.asarray(ref),
                                    rtol=1e-5, atol=2e-5)

    print("KERNEL_OK")
</pallas_src>

<mosaic_0001>
module attributes {stable_mosaic.version = 11 : i64} {
  func.func @_kernel_pooling_kernel(%arg0: i32, %arg1: memref<1x8x16xf32, #tpu.memory_space<vmem>>, %arg2: memref<1x8x1xf32, #tpu.memory_space<vmem>>, %arg3: memref<1x1x16xf32, #tpu.memory_space<vmem>>, %arg4: memref<1x1x128xf32, #tpu.memory_space<vmem>>) attributes {dimension_semantics = [#tpu.dimension_semantics<parallel>], iteration_bounds = array<i64: 2>, scalar_prefetch = 0 : i64, scratch_operands = 0 : i64, tpu.core_type = #tpu.core_type<tc>, window_params = [{transform_indices = @transform_0, window_bounds = array<i64: 1, 8, 16>}, {transform_indices = @transform_1, window_bounds = array<i64: 1, 8, 1>}, {transform_indices = @transform_2, window_bounds = array<i64: 1, 1, 16>}, {transform_indices = @transform_3, window_bounds = array<i64: 1, 1, 128>}]} {
    %c0 = arith.constant 0 : index
    %c0_0 = arith.constant 0 : index
    %c0_1 = arith.constant 0 : index
    %0 = vector.load %arg3[%c0, %c0_0, %c0_1] : memref<1x1x16xf32, #tpu.memory_space<vmem>>, vector<1x1x16xf32>
    %c0_2 = arith.constant 0 : index
    %c0_3 = arith.constant 0 : index
    %c0_4 = arith.constant 0 : index
    %1 = vector.load %arg2[%c0_2, %c0_3, %c0_4] : memref<1x8x1xf32, #tpu.memory_space<vmem>>, vector<1x8x1xf32>
    %cst = arith.constant 0.000000e+00 : f32
    %2 = vector.broadcast %cst : f32 to vector<1x1x16xf32>
    %3 = arith.cmpf ogt, %0, %2 : vector<1x1x16xf32>
    %c0_5 = arith.constant 0 : index
    %c0_6 = arith.constant 0 : index
    %c0_7 = arith.constant 0 : index
    %4 = vector.load %arg1[%c0_5, %c0_6, %c0_7] : memref<1x8x16xf32, #tpu.memory_space<vmem>>, vector<1x8x16xf32>
    %cst_8 = arith.constant 1.000000e-01 : f32
    %5 = vector.shape_cast %3 : vector<1x1x16xi1> to vector<1x1x16xi1>
    %6 = vector.broadcast %5 : vector<1x1x16xi1> to vector<1x8x16xi1>
    %7 = vector.broadcast %cst_8 : f32 to vector<1x8x16xf32>
    %8 = arith.select %6, %4, %7 : vector<1x8x16xi1>, vector<1x8x16xf32>
    %cst_9 = arith.constant 1.000000e+00 : f32
    %9 = vector.broadcast %cst_9 : f32 to vector<1x8x16xf32>
    %10 = arith.subf %8, %9 : vector<1x8x16xf32>
    %11 = arith.mulf %10, %10 : vector<1x8x16xf32>
    %cst_10 = arith.constant -5.000000e+05 : f32
    %12 = vector.broadcast %cst_10 : f32 to vector<1x8x16xf32>
    %13 = arith.mulf %12, %11 : vector<1x8x16xf32>
    %14 = math.exp %13 : vector<1x8x16xf32>
    %15 = vector.broadcast %0 : vector<1x1x16xf32> to vector<1x8x16xf32>
    %16 = arith.mulf %14, %15 : vector<1x8x16xf32>
    %cst_11 = arith.constant dense<0.000000e+00> : vector<1x8xf32>
    %17 = vector.multi_reduction <add>, %16, %cst_11 [2] : vector<1x8x16xf32> to vector<1x8xf32>
    %18 = vector.shape_cast %17 : vector<1x8xf32> to vector<1x8x1xf32>
    %cst_12 = arith.constant 1.000000e-10 : f32
    %19 = vector.broadcast %cst_12 : f32 to vector<1x8x1xf32>
    %20 = arith.maximumf %18, %19 : vector<1x8x1xf32>
    %21 = math.log %20 : vector<1x8x1xf32>
    %22 = arith.mulf %21, %1 : vector<1x8x1xf32>
    %cst_13 = arith.constant dense<0.000000e+00> : vector<1x1xf32>
    %23 = vector.multi_reduction <add>, %22, %cst_13 [1] : vector<1x8x1xf32> to vector<1x1xf32>
    %cst_14 = arith.constant -4.000000e+00 : f32
    %cst_15 = arith.constant 4.000000e+00 : f32
    %24 = vector.broadcast %cst_14 : f32 to vector<1x8x16xf32>
    %25 = arith.maximumf %24, %8 : vector<1x8x16xf32>
    %26 = vector.broadcast %cst_15 : f32 to vector<1x8x16xf32>
    %27 = arith.minimumf %26, %25 : vector<1x8x16xf32>
    %cst_16 = arith.constant 1.000000e-01 : f32
    %28 = vector.broadcast %cst_16 : f32 to vector<1x8x16xf32>
    %29 = arith.subf %27, %28 : vector<1x8x16xf32>
    %30 = arith.mulf %29, %29 : vector<1x8x16xf32>
    %cst_17 = arith.constant -5.000000e+01 : f32
    %31 = vector.broadcast %cst_17 : f32 to vector<1x8x16xf32>
    %32 = arith.mulf %31, %30 : vector<1x8x16xf32>
    %33 = math.exp %32 : vector<1x8x16xf32>
    %34 = vector.broadcast %0 : vector<1x1x16xf32> to vector<1x8x16xf32>
    %35 = arith.mulf %33, %34 : vector<1x8x16xf32>
    %cst_18 = arith.constant dense<0.000000e+00> : vector<1x8xf32>
    %36 = vector.multi_reduction <add>, %35, %cst_18 [2] : vector<1x8x16xf32> to vector<1x8xf32>
    %37 = vector.shape_cast %36 : vector<1x8xf32> to vector<1x8x1xf32>
    %cst_19 = arith.constant 1.000000e-10 : f32
    %38 = vector.broadcast %cst_19 : f32 to vector<1x8x1xf32>
    %39 = arith.maximumf %37, %38 : vector<1x8x1xf32>
    %40 = math.log %39 : vector<1x8x1xf32>
    %41 = arith.mulf %40, %1 : vector<1x8x1xf32>
    %cst_20 = arith.constant dense<0.000000e+00> : vector<1x1xf32>
    %42 = vector.multi_reduction <add>, %41, %cst_20 [1] : vector<1x8x1xf32> to vector<1x1xf32>
    %cst_21 = arith.constant 2.000000e+01 : f32
    %43 = vector.broadcast %cst_21 : f32 to vector<1x8x16xf32>
    %44 = arith.mulf %43, %27 : vector<1x8x16xf32>
    %45 = math.exp %44 : vector<1x8x16xf32>
    %46 = arith.mulf %35, %45 : vector<1x8x16xf32>
    %cst_22 = arith.constant 0.0183156393 : f32
    %47 = vector.broadcast %cst_22 : f32 to vector<1x8x16xf32>
    %48 = arith.mulf %46, %47 : vector<1x8x16xf32>
    %cst_23 = arith.constant dense<0.000000e+00> : vector<1x8xf32>
    %49 = vector.multi_reduction <add>, %48, %cst_23 [2] : vector<1x8x16xf32> to vector<1x8xf32>
    %50 = vector.shape_cast %49 : vector<1x8xf32> to vector<1x8x1xf32>
    %cst_24 = arith.constant 1.000000e-10 : f32
    %51 = vector.broadcast %cst_24 : f32 to vector<1x8x1xf32>
    %52 = arith.maximumf %50, %51 : vector<1x8x1xf32>
    %53 = math.log %52 : vector<1x8x1xf32>
    %54 = arith.mulf %53, %1 : vector<1x8x1xf32>
    %cst_25 = arith.constant dense<0.000000e+00> : vector<1x1xf32>
    %55 = vector.multi_reduction <add>, %54, %cst_25 [1] : vector<1x8x1xf32> to vector<1x1xf32>
    %56 = arith.mulf %48, %45 : vector<1x8x16xf32>
    %cst_26 = arith.constant 3.35462624E-4 : f32
    %57 = vector.broadcast %cst_26 : f32 to vector<1x8x16xf32>
    %58 = arith.mulf %56, %57 : vector<1x8x16xf32>
    %cst_27 = arith.constant dense<0.000000e+00> : vector<1x8xf32>
    %59 = vector.multi_reduction <add>, %58, %cst_27 [2] : vector<1x8x16xf32> to vector<1x8xf32>
    %60 = vector.shape_cast %59 : vector<1x8xf32> to vector<1x8x1xf32>
    %cst_28 = arith.constant 1.000000e-10 : f32
    %61 = vector.broadcast %cst_28 : f32 to vector<1x8x1xf32>
    %62 = arith.maximumf %60, %61 : vector<1x8x1xf32>
    %63 = math.log %62 : vector<1x8x1xf32>
    %64 = arith.mulf %63, %1 : vector<1x8x1xf32>
    %cst_29 = arith.constant dense<0.000000e+00> : vector<1x1xf32>
    %65 = vector.multi_reduction <add>, %64, %cst_29 [1] : vector<1x8x1xf32> to vector<1x1xf32>
    %66 = arith.mulf %58, %45 : vector<1x8x16xf32>
    %cst_30 = arith.constant 6.14421242E-6 : f32
    %67 = vector.broadcast %cst_30 : f32 to vector<1x8x16xf32>
    %68 = arith.mulf %66, %67 : vector<1x8x16xf32>
    %cst_31 = arith.constant dense<0.000000e+00> : vector<1x8xf32>
    %69 = vector.multi_reduction <add>, %68, %cst_31 [2] : vector<1x8x16xf32> to vector<1x8xf32>
    %70 = vector.shape_cast %69 : vector<1x8xf32> to vector<1x8x1xf32>
    %cst_32 = arith.constant 1.000000e-10 : f32
    %71 = vector.broadcast %cst_32 : f32 to vector<1x8x1xf32>
    %72 = arith.maximumf %70, %71 : vector<1x8x1xf32>
    %73 = math.log %72 : vector<1x8x1xf32>
    %74 = arith.mulf %73, %1 : vector<1x8x1xf32>
    %cst_33 = arith.constant dense<0.000000e+00> : vector<1x1xf32>
    %75 = vector.multi_reduction <add>, %74, %cst_33 [1] : vector<1x8x1xf32> to vector<1x1xf32>
    %76 = arith.mulf %68, %45 : vector<1x8x16xf32>
    %cst_34 = arith.constant 1.12535176E-7 : f32
    %77 = vector.broadcast %cst_34 : f32 to vector<1x8x16xf32>
    %78 = arith.mulf %76, %77 : vector<1x8x16xf32>
    %cst_35 = arith.constant dense<0.000000e+00> : vector<1x8xf32>
    %79 = vector.multi_reduction <add>, %78, %cst_35 [2] : vector<1x8x16xf32> to vector<1x8xf32>
    %80 = vector.shape_cast %79 : vector<1x8xf32> to vector<1x8x1xf32>
    %cst_36 = arith.constant 1.000000e-10 : f32
    %81 = vector.broadcast %cst_36 : f32 to vector<1x8x1xf32>
    %82 = arith.maximumf %80, %81 : vector<1x8x1xf32>
    %83 = math.log %82 : vector<1x8x1xf32>
    %84 = arith.mulf %83, %1 : vector<1x8x1xf32>
    %cst_37 = arith.constant dense<0.000000e+00> : vector<1x1xf32>
    %85 = vector.multi_reduction <add>, %84, %cst_37 [1] : vector<1x8x1xf32> to vector<1x1xf32>
    %cst_38 = arith.constant -2.000000e+01 : f32
    %86 = vector.broadcast %cst_38 : f32 to vector<1x8x16xf32>
    %87 = arith.mulf %86, %27 : vector<1x8x16xf32>
    %88 = math.exp %87 : vector<1x8x16xf32>
    %89 = arith.mulf %35, %88 : vector<1x8x16xf32>
    %cst_39 = arith.constant 1.000000e+00 : f32
    %90 = vector.broadcast %cst_39 : f32 to vector<1x8x16xf32>
    %91 = arith.mulf %89, %90 : vector<1x8x16xf32>
    %cst_40 = arith.constant dense<0.000000e+00> : vector<1x8xf32>
    %92 = vector.multi_reduction <add>, %91, %cst_40 [2] : vector<1x8x16xf32> to vector<1x8xf32>
    %93 = vector.shape_cast %92 : vector<1x8xf32> to vector<1x8x1xf32>
    %cst_41 = arith.constant 1.000000e-10 : f32
    %94 = vector.broadcast %cst_41 : f32 to vector<1x8x1xf32>
    %95 = arith.maximumf %93, %94 : vector<1x8x1xf32>
    %96 = math.log %95 : vector<1x8x1xf32>
    %97 = arith.mulf %96, %1 : vector<1x8x1xf32>
    %cst_42 = arith.constant dense<0.000000e+00> : vector<1x1xf32>
    %98 = vector.multi_reduction <add>, %97, %cst_42 [1] : vector<1x8x1xf32> to vector<1x1xf32>
    %99 = arith.mulf %91, %88 : vector<1x8x16xf32>
    %cst_43 = arith.constant 0.0183156393 : f32
    %100 = vector.broadcast %cst_43 : f32 to vector<1x8x16xf32>
    %101 = arith.mulf %99, %100 : vector<1x8x16xf32>
    %cst_44 = arith.constant dense<0.000000e+00> : vector<1x8xf32>
    %102 = vector.multi_reduction <add>, %101, %cst_44 [2] : vector<1x8x16xf32> to vector<1x8xf32>
    %103 = vector.shape_cast %102 : vector<1x8xf32> to vector<1x8x1xf32>
    %cst_45 = arith.constant 1.000000e-10 : f32
    %104 = vector.broadcast %cst_45 : f32 to vector<1x8x1xf32>
    %105 = arith.maximumf %103, %104 : vector<1x8x1xf32>
    %106 = math.log %105 : vector<1x8x1xf32>
    %107 = arith.mulf %106, %1 : vector<1x8x1xf32>
    %cst_46 = arith.constant dense<0.000000e+00> : vector<1x1xf32>
    %108 = vector.multi_reduction <add>, %107, %cst_46 [1] : vector<1x8x1xf32> to vector<1x1xf32>
    %109 = arith.mulf %101, %88 : vector<1x8x16xf32>
    %cst_47 = arith.constant 3.35462624E-4 : f32
    %110 = vector.broadcast %cst_47 : f32 to vector<1x8x16xf32>
    %111 = arith.mulf %109, %110 : vector<1x8x16xf32>
    %cst_48 = arith.constant dense<0.000000e+00> : vector<1x8xf32>
    %112 = vector.multi_reduction <add>, %111, %cst_48 [2] : vector<1x8x16xf32> to vector<1x8xf32>
    %113 = vector.shape_cast %112 : vector<1x8xf32> to vector<1x8x1xf32>
    %cst_49 = arith.constant 1.000000e-10 : f32
    %114 = vector.broadcast %cst_49 : f32 to vector<1x8x1xf32>
    %115 = arith.maximumf %113, %114 : vector<1x8x1xf32>
    %116 = math.log %115 : vector<1x8x1xf32>
    %117 = arith.mulf %116, %1 : vector<1x8x1xf32>
    %cst_50 = arith.constant dense<0.000000e+00> : vector<1x1xf32>
    %118 = vector.multi_reduction <add>, %117, %cst_50 [1] : vector<1x8x1xf32> to vector<1x1xf32>
    %119 = arith.mulf %111, %88 : vector<1x8x16xf32>
    %cst_51 = arith.constant 6.14421242E-6 : f32
    %120 = vector.broadcast %cst_51 : f32 to vector<1x8x16xf32>
    %121 = arith.mulf %119, %120 : vector<1x8x16xf32>
    %cst_52 = arith.constant dense<0.000000e+00> : vector<1x8xf32>
    %122 = vector.multi_reduction <add>, %121, %cst_52 [2] : vector<1x8x16xf32> to vector<1x8xf32>
    %123 = vector.shape_cast %122 : vector<1x8xf32> to vector<1x8x1xf32>
    %cst_53 = arith.constant 1.000000e-10 : f32
    %124 = vector.broadcast %cst_53 : f32 to vector<1x8x1xf32>
    %125 = arith.maximumf %123, %124 : vector<1x8x1xf32>
    %126 = math.log %125 : vector<1x8x1xf32>
    %127 = arith.mulf %126, %1 : vector<1x8x1xf32>
    %cst_54 = arith.constant dense<0.000000e+00> : vector<1x1xf32>
    %128 = vector.multi_reduction <add>, %127, %cst_54 [1] : vector<1x8x1xf32> to vector<1x1xf32>
    %129 = arith.mulf %121, %88 : vector<1x8x16xf32>
    %cst_55 = arith.constant 1.12535176E-7 : f32
    %130 = vector.broadcast %cst_55 : f32 to vector<1x8x16xf32>
    %131 = arith.mulf %129, %130 : vector<1x8x16xf32>
    %cst_56 = arith.constant dense<0.000000e+00> : vector<1x8xf32>
    %132 = vector.multi_reduction <add>, %131, %cst_56 [2] : vector<1x8x16xf32> to vector<1x8xf32>
    %133 = vector.shape_cast %132 : vector<1x8xf32> to vector<1x8x1xf32>
    %cst_57 = arith.constant 1.000000e-10 : f32
    %134 = vector.broadcast %cst_57 : f32 to vector<1x8x1xf32>
    %135 = arith.maximumf %133, %134 : vector<1x8x1xf32>
    %136 = math.log %135 : vector<1x8x1xf32>
    %137 = arith.mulf %136, %1 : vector<1x8x1xf32>
    %cst_58 = arith.constant dense<0.000000e+00> : vector<1x1xf32>
    %138 = vector.multi_reduction <add>, %137, %cst_58 [1] : vector<1x8x1xf32> to vector<1x1xf32>
    %139 = tpu.iota {dimensions = array<i32: 1>} : vector<1x128xi32>
    %cst_59 = arith.constant 0.000000e+00 : f32
    %140 = vector.broadcast %cst_59 : f32 to vector<1x128xf32>
    %c0_i32 = arith.constant 0 : i32
    %141 = vector.broadcast %c0_i32 : i32 to vector<1x128xi32>
    %142 = arith.cmpi eq, %139, %141 : vector<1x128xi32>
    %cst_60 = arith.constant 0.000000e+00 : f32
    %143 = vector.shape_cast %23 : vector<1x1xf32> to vector<1x1xf32>
    %144 = vector.broadcast %143 : vector<1x1xf32> to vector<1x128xf32>
    %145 = vector.broadcast %cst_60 : f32 to vector<1x128xf32>
    %146 = arith.select %142, %144, %145 : vector<1x128xi1>, vector<1x128xf32>
    %147 = arith.addf %140, %146 : vector<1x128xf32>
    %c1_i32 = arith.constant 1 : i32
    %148 = vector.broadcast %c1_i32 : i32 to vector<1x128xi32>
    %149 = arith.cmpi eq, %139, %148 : vector<1x128xi32>
    %cst_61 = arith.constant 0.000000e+00 : f32
    %150 = vector.shape_cast %85 : vector<1x1xf32> to vector<1x1xf32>
    %151 = vector.broadcast %150 : vector<1x1xf32> to vector<1x128xf32>
    %152 = vector.broadcast %cst_61 : f32 to vector<1x128xf32>
    %153 = arith.select %149, %151, %152 : vector<1x128xi1>, vector<1x128xf32>
    %154 = arith.addf %147, %153 : vector<1x128xf32>
    %c2_i32 = arith.constant 2 : i32
    %155 = vector.broadcast %c2_i32 : i32 to vector<1x128xi32>
    %156 = arith.cmpi eq, %139, %155 : vector<1x128xi32>
    %cst_62 = arith.constant 0.000000e+00 : f32
    %157 = vector.shape_cast %75 : vector<1x1xf32> to vector<1x1xf32>
    %158 = vector.broadcast %157 : vector<1x1xf32> to vector<1x128xf32>
    %159 = vector.broadcast %cst_62 : f32 to vector<1x128xf32>
    %160 = arith.select %156, %158, %159 : vector<1x128xi1>, vector<1x128xf32>
    %161 = arith.addf %154, %160 : vector<1x128xf32>
    %c3_i32 = arith.constant 3 : i32
    %162 = vector.broadcast %c3_i32 : i32 to vector<1x128xi32>
    %163 = arith.cmpi eq, %139, %162 : vector<1x128xi32>
    %cst_63 = arith.constant 0.000000e+00 : f32
    %164 = vector.shape_cast %65 : vector<1x1xf32> to vector<1x1xf32>
    %165 = vector.broadcast %164 : vector<1x1xf32> to vector<1x128xf32>
    %166 = vector.broadcast %cst_63 : f32 to vector<1x128xf32>
    %167 = arith.select %163, %165, %166 : vector<1x128xi1>, vector<1x128xf32>
    %168 = arith.addf %161, %167 : vector<1x128xf32>
    %c4_i32 = arith.constant 4 : i32
    %169 = vector.broadcast %c4_i32 : i32 to vector<1x128xi32>
    %170 = arith.cmpi eq, %139, %169 : vector<1x128xi32>
    %cst_64 = arith.constant 0.000000e+00 : f32
    %171 = vector.shape_cast %55 : vector<1x1xf32> to vector<1x1xf32>
    %172 = vector.broadcast %171 : vector<1x1xf32> to vector<1x128xf32>
    %173 = vector.broadcast %cst_64 : f32 to vector<1x128xf32>
    %174 = arith.select %170, %172, %173 : vector<1x128xi1>, vector<1x128xf32>
    %175 = arith.addf %168, %174 : vector<1x128xf32>
    %c5_i32 = arith.constant 5 : i32
    %176 = vector.broadcast %c5_i32 : i32 to vector<1x128xi32>
    %177 = arith.cmpi eq, %139, %176 : vector<1x128xi32>
    %cst_65 = arith.constant 0.000000e+00 : f32
    %178 = vector.shape_cast %42 : vector<1x1xf32> to vector<1x1xf32>
    %179 = vector.broadcast %178 : vector<1x1xf32> to vector<1x128xf32>
    %180 = vector.broadcast %cst_65 : f32 to vector<1x128xf32>
    %181 = arith.select %177, %179, %180 : vector<1x128xi1>, vector<1x128xf32>
    %182 = arith.addf %175, %181 : vector<1x128xf32>
    %c6_i32 = arith.constant 6 : i32
    %183 = vector.broadcast %c6_i32 : i32 to vector<1x128xi32>
    %184 = arith.cmpi eq, %139, %183 : vector<1x128xi32>
    %cst_66 = arith.constant 0.000000e+00 : f32
    %185 = vector.shape_cast %98 : vector<1x1xf32> to vector<1x1xf32>
    %186 = vector.broadcast %185 : vector<1x1xf32> to vector<1x128xf32>
    %187 = vector.broadcast %cst_66 : f32 to vector<1x128xf32>
    %188 = arith.select %184, %186, %187 : vector<1x128xi1>, vector<1x128xf32>
    %189 = arith.addf %182, %188 : vector<1x128xf32>
    %c7_i32 = arith.constant 7 : i32
    %190 = vector.broadcast %c7_i32 : i32 to vector<1x128xi32>
    %191 = arith.cmpi eq, %139, %190 : vector<1x128xi32>
    %cst_67 = arith.constant 0.000000e+00 : f32
    %192 = vector.shape_cast %108 : vector<1x1xf32> to vector<1x1xf32>
    %193 = vector.broadcast %192 : vector<1x1xf32> to vector<1x128xf32>
    %194 = vector.broadcast %cst_67 : f32 to vector<1x128xf32>
    %195 = arith.select %191, %193, %194 : vector<1x128xi1>, vector<1x128xf32>
    %196 = arith.addf %189, %195 : vector<1x128xf32>
    %c8_i32 = arith.constant 8 : i32
    %197 = vector.broadcast %c8_i32 : i32 to vector<1x128xi32>
    %198 = arith.cmpi eq, %139, %197 : vector<1x128xi32>
    %cst_68 = arith.constant 0.000000e+00 : f32
    %199 = vector.shape_cast %118 : vector<1x1xf32> to vector<1x1xf32>
    %200 = vector.broadcast %199 : vector<1x1xf32> to vector<1x128xf32>
    %201 = vector.broadcast %cst_68 : f32 to vector<1x128xf32>
    %202 = arith.select %198, %200, %201 : vector<1x128xi1>, vector<1x128xf32>
    %203 = arith.addf %196, %202 : vector<1x128xf32>
    %c9_i32 = arith.constant 9 : i32
    %204 = vector.broadcast %c9_i32 : i32 to vector<1x128xi32>
    %205 = arith.cmpi eq, %139, %204 : vector<1x128xi32>
    %cst_69 = arith.constant 0.000000e+00 : f32
    %206 = vector.shape_cast %128 : vector<1x1xf32> to vector<1x1xf32>
    %207 = vector.broadcast %206 : vector<1x1xf32> to vector<1x128xf32>
    %208 = vector.broadcast %cst_69 : f32 to vector<1x128xf32>
    %209 = arith.select %205, %207, %208 : vector<1x128xi1>, vector<1x128xf32>
    %210 = arith.addf %203, %209 : vector<1x128xf32>
    %c10_i32 = arith.constant 10 : i32
    %211 = vector.broadcast %c10_i32 : i32 to vector<1x128xi32>
    %212 = arith.cmpi eq, %139, %211 : vector<1x128xi32>
    %cst_70 = arith.constant 0.000000e+00 : f32
    %213 = vector.shape_cast %138 : vector<1x1xf32> to vector<1x1xf32>
    %214 = vector.broadcast %213 : vector<1x1xf32> to vector<1x128xf32>
    %215 = vector.broadcast %cst_70 : f32 to vector<1x128xf32>
    %216 = arith.select %212, %214, %215 : vector<1x128xi1>, vector<1x128xf32>
    %217 = arith.addf %210, %216 : vector<1x128xf32>
    %c0_71 = arith.constant 0 : index
    %c0_72 = arith.constant 0 : index
    %c0_73 = arith.constant 0 : index
    %218 = vector.load %arg4[%c0_71, %c0_72, %c0_73] : memref<1x1x128xf32, #tpu.memory_space<vmem>>, vector<1x1x128xf32>
    %219 = vector.shape_cast %218 : vector<1x1x128xf32> to vector<1x128xf32>
    %220 = vector.shape_cast %217 : vector<1x128xf32> to vector<1x1x128xf32>
    tpu.vector_store %arg4[%c0_71, %c0_72, %c0_73], %220 {strides = array<i32>} : memref<1x1x128xf32, #tpu.memory_space<vmem>>, vector<1x1x128xf32>,
    return
  }
  func.func @transform_0(%arg0: i32) -> (i32, i32, i32) {
    %c0_i32 = arith.constant 0 : i32
    %c0_i32_0 = arith.constant 0 : i32
    %c0_i32_1 = arith.constant 0 : i32
    return %arg0, %c0_i32, %c0_i32_0 : i32, i32, i32
  }
  func.func @transform_1(%arg0: i32) -> (i32, i32, i32) {
    %c0_i32 = arith.constant 0 : i32
    %c0_i32_0 = arith.constant 0 : i32
    %c0_i32_1 = arith.constant 0 : i32
    return %arg0, %c0_i32, %c0_i32_0 : i32, i32, i32
  }
  func.func @transform_2(%arg0: i32) -> (i32, i32, i32) {
    %c0_i32 = arith.constant 0 : i32
    %c0_i32_0 = arith.constant 0 : i32
    %c0_i32_1 = arith.constant 0 : i32
    return %arg0, %c0_i32, %c0_i32_0 : i32, i32, i32
  }
  func.func @transform_3(%arg0: i32) -> (i32, i32, i32) {
    %c0_i32 = arith.constant 0 : i32
    %c0_i32_0 = arith.constant 0 : i32
    %c0_i32_1 = arith.constant 0 : i32
    return %arg0, %c0_i32, %c0_i32_0 : i32, i32, i32
  }
}

</mosaic_0001>

<llo_original>
// kernel: tpu_custom_call.1
$region0: #{tpu_custom_call.1}
  #allocation0 [shape = 'u32[]', space=smem, size = 0x4, offset = 0x4, fixed_abs, tag = 'smem constant byte address 0x4 - core index']
  #allocation1 [shape = 'u32[72,128]{1,0:T(1,128)}', space=vmem, size = 0x9000, scoped, tag = 'internal scratch']
  %s0 = inlined_call_operand.vmem [shape: f32[2,8,16], index: 0, kind: input, shape index: {}]
  %s1 = inlined_call_operand.vmem [shape: f32[2,8,1], index: 1, kind: input, shape index: {}]
  %s2 = inlined_call_operand.vmem [shape: f32[2,1,16], index: 2, kind: input, shape index: {}]
  %s3 = inlined_call_operand.hbm [shape: f32[2,1,128], index: 3, kind: output, shape index: {}]
  %s4 = sld [smem:[#allocation0]]
  $region45: #{tpu_custom_call.1} parent=0
    _
  %s6 = ssub.s32 1, %s4
  %s7 = scalar_select 0, %s6, %s4
  $region1: #{tpu_custom_call.1} parent=0
    #allocation2 [shape = 'u8[1024]{0}', space=vmem, size = 0x400, scoped, tag = 'output window, operand 0']
    #allocation3 [shape = 's32[2]{0}', space=sflag, size = 0x8, scoped, tag = 'scoped memory for tpu_custom_call.1']
    %8 = vsyncpa [#allocation3], 0
    %s9 = scalar_lea.sflag [#allocation3], 1
    %10 = vsyncpa %s9, 0
    loop: start=0, step=1, limit=4
    $region2: #{tpu_custom_call.1} parent=1 // loop_pre_header
      _
    $region3: #{tpu_custom_call.1} parent=1 // loop_header
      %s12 = sphi 0, %s16
      %p13 = scmp.ge.s32.totalorder %s12, 4
      %s22 = sphi 0, %s24
      %s25 = sphi 0, %s22
      %s26 = sphi 0, %s25
      %s42 = sphi 0, %s26
      %s48 = sphi 0, %s50
      %s51 = sphi 0, %s48
      %s52 = sphi 0, %s51
      %s68 = sphi 0, %s52
      %s74 = sphi 0, %s76
      %s77 = sphi 0, %s74
      %s78 = sphi 0, %s77
      %s94 = sphi 0, %s78
      %s100 = sphi 0, %s102
      %s103 = sphi 0, %s100
      %s104 = sphi 0, %s103
      %s120 = sphi 0, %s104
    $region4: #{tpu_custom_call.1} parent=1 // loop_header_branch
      %15 = sbr.rel (%p13) target = $region8
    $region5: #{tpu_custom_call.1} parent=1 // loop_body
      %s17 = ssub.s32 %s12, 1
      %s18 = ssub.s32 %s12, 2
      %s19 = sadd.s32 %s12, 1
      %s20 = ssub.s32 %s12, %s19
      %p21 = scmp.eq.s32.totalorder %s20, 0
      %s23 = sadd.s32 %s22, 1
      %s24 = scalar_select %p21, %s22, %s23
      %p27 = pneg %p21
      %p28 = scmp.eq.s32.totalorder %s12, 1
      %p29 = por %p27, %p28
      %p30 = scmp.ne.s32.totalorder %s22, %s25
      %p31 = scmp.eq.s32.totalorder %s12, 0
      %p32 = por %p30, %p31
      %p33 = scmp.ne.s32.totalorder %s22, %s25
      %p34 = scmp.eq.s32.totalorder %s17, 1
      %p35 = por %p33, %p34
      %p36 = scmp.ne.s32.totalorder %s25, %s26
      %p37 = scmp.eq.s32.totalorder %s17, 0
      %p38 = por %p36, %p37
      %p39 = scmp.ne.s32.totalorder %s25, %s26
      %p40 = scmp.eq.s32.totalorder %s18, 1
      %p41 = por %p39, %p40
      %p43 = scmp.ne.s32.totalorder %s26, %s42
      %p44 = scmp.eq.s32.totalorder %s18, 0
      %p45 = por %p43, %p44
      %s46 = ssub.s32 %s12, %s19
      %p47 = scmp.eq.s32.totalorder %s46, 0
      %s49 = sadd.s32 %s48, 1
      %s50 = scalar_select %p47, %s48, %s49
      %p53 = pneg %p47
      %p54 = scmp.eq.s32.totalorder %s12, 1
      %p55 = por %p53, %p54
      %p56 = scmp.ne.s32.totalorder %s48, %s51
      %p57 = scmp.eq.s32.totalorder %s12, 0
      %p58 = por %p56, %p57
      %p59 = scmp.ne.s32.totalorder %s48, %s51
      %p60 = scmp.eq.s32.totalorder %s17, 1
      %p61 = por %p59, %p60
      %p62 = scmp.ne.s32.totalorder %s51, %s52
      %p63 = scmp.eq.s32.totalorder %s17, 0
      %p64 = por %p62, %p63
      %p65 = scmp.ne.s32.totalorder %s51, %s52
      %p66 = scmp.eq.s32.totalorder %s18, 1
      %p67 = por %p65, %p66
      %p69 = scmp.ne.s32.totalorder %s52, %s68
      %p70 = scmp.eq.s32.totalorder %s18, 0
      %p71 = por %p69, %p70
      %s72 = ssub.s32 %s12, %s19
      %p73 = scmp.eq.s32.totalorder %s72, 0
      %s75 = sadd.s32 %s74, 1
      %s76 = scalar_select %p73, %s74, %s75
      %p79 = pneg %p73
      %p80 = scmp.eq.s32.totalorder %s12, 1
      %p81 = por %p79, %p80
      %p82 = scmp.ne.s32.totalorder %s74, %s77
      %p83 = scmp.eq.s32.totalorder %s12, 0
      %p84 = por %p82, %p83
      %p85 = scmp.ne.s32.totalorder %s74, %s77
      %p86 = scmp.eq.s32.totalorder %s17, 1
      %p87 = por %p85, %p86
      %p88 = scmp.ne.s32.totalorder %s77, %s78
      %p89 = scmp.eq.s32.totalorder %s17, 0
      %p90 = por %p88, %p89
      %p91 = scmp.ne.s32.totalorder %s77, %s78
      %p92 = scmp.eq.s32.totalorder %s18, 1
      %p93 = por %p91, %p92
      %p95 = scmp.ne.s32.totalorder %s78, %s94
      %p96 = scmp.eq.s32.totalorder %s18, 0
      %p97 = por %p95, %p96
      %s98 = ssub.s32 %s12, %s19
      %p99 = scmp.eq.s32.totalorder %s98, 0
      %s101 = sadd.s32 %s100, 1
      %s102 = scalar_select %p99, %s100, %s101
      %p105 = pneg %p99
      %p106 = scmp.eq.s32.totalorder %s12, 1
      %p107 = por %p105, %p106
      %p108 = scmp.ne.s32.totalorder %s100, %s103
      %p109 = scmp.eq.s32.totalorder %s12, 0
      %p110 = por %p108, %p109
      %p111 = scmp.ne.s32.totalorder %s100, %s103
      %p112 = scmp.eq.s32.totalorder %s17, 1
      %p113 = por %p111, %p112
      %p114 = scmp.ne.s32.totalorder %s103, %s104
      %p115 = scmp.eq.s32.totalorder %s17, 0
      %p116 = por %p114, %p115
      %p117 = scmp.ne.s32.totalorder %s103, %s104
      %p118 = scmp.eq.s32.totalorder %s18, 1
      %p119 = por %p117, %p118
      %p121 = scmp.ne.s32.totalorder %s104, %s120
      %p122 = scmp.eq.s32.totalorder %s18, 0
      %p123 = por %p121, %p122
      %p124 = scmp.le.s32.totalorder 1, %s12
      %p125 = scmp.lt.s32.totalorder %s12, 3
      %p126 = pnand %p124, %p125
      %p127 = pneg %p126
      // Predicated region
      $region9: #{tpu_custom_call.1} parent=5 // pred_check
        _
      $region10: #{tpu_custom_call.1} parent=5 // pred_check_branch
        %129 = sbr.rel (%p126) target = $region12
      $region11: #{tpu_custom_call.1} parent=5 // pred_region
        %s130 = ssub.s32 %s12, 1
      $region12: #{tpu_custom_call.1} parent=5 // pred_fallthru
        _
      %p131 = scmp.lt.s32.totalorder %s12, 2
      // Predicated region
      $region13: #{tpu_custom_call.1} parent=5 // pred_check
        %p132 = pneg %p131
      $region14: #{tpu_custom_call.1} parent=5 // pred_check_branch
        %134 = sbr.rel (%p132) target = $region16
      $region15: #{tpu_custom_call.1} parent=5 // pred_region
        // Predicated region
        $region17: #{tpu_custom_call.1} parent=15 // pred_check
          %p135 = pneg %p32
        $region18: #{tpu_custom_call.1} parent=15 // pred_check_branch
          %137 = sbr.rel (%p135) target = $region20
        $region19: #{tpu_custom_call.1} parent=15 // pred_region
          %p138 = scmp.lt.s32.totalorder %s12, 1
          %s139 = scalar_select %p138, %s12, 1
          %s140 = smul.addr %s139, 8
          %s141 = scalar_lea.vmem %s0, %s140
        $region20: #{tpu_custom_call.1} parent=15 // pred_fallthru
          _
        // Predicated region
        $region21: #{tpu_custom_call.1} parent=15 // pred_check
          %p142 = pneg %p58
        $region22: #{tpu_custom_call.1} parent=15 // pred_check_branch
          %144 = sbr.rel (%p142) target = $region24
        $region23: #{tpu_custom_call.1} parent=15 // pred_region
          %p145 = scmp.lt.s32.totalorder %s12, 1
          %s146 = scalar_select %p145, %s12, 1
          %s147 = smul.addr %s146, 8
          %s148 = scalar_lea.vmem %s1, %s147
        $region24: #{tpu_custom_call.1} parent=15 // pred_fallthru
          _
        // Predicated region
        $region25: #{tpu_custom_call.1} parent=15 // pred_check
          %p149 = pneg %p84
        $region26: #{tpu_custom_call.1} parent=15 // pred_check_branch
          %151 = sbr.rel (%p149) target = $region28
        $region27: #{tpu_custom_call.1} parent=15 // pred_region
          %p152 = scmp.lt.s32.totalorder %s12, 1
          %s153 = scalar_select %p152, %s12, 1
          %s154 = scalar_lea.vmem %s2, %s153
        $region28: #{tpu_custom_call.1} parent=15 // pred_fallthru
          _
      $region16: #{tpu_custom_call.1} parent=5 // pred_fallthru
        _
      %p155 = scmp.le.s32.totalorder 1, %s12
      %p156 = scmp.lt.s32.totalorder %s12, 3
      %p157 = pnand %p155, %p156
      %p158 = pneg %p157
      // Predicated region
      $region29: #{tpu_custom_call.1} parent=5 // pred_check
        _
      $region30: #{tpu_custom_call.1} parent=5 // pred_check_branch
        %160 = sbr.rel (%p157) target = $region32
      $region31: #{tpu_custom_call.1} parent=5 // pred_region
        %s161 = ssub.s32 %s12, 1
        %p162 = scmp.lt.s32.totalorder %s17, 1
        %s163 = scalar_select %p162, %s17, 1
        %s164 = smul.addr %s163, 8
        %s165 = scalar_lea.vmem %s0, %s164
        %p166 = pneg %p38
        %p167 = pneg %p35
        %p168 = scmp.lt.s32.totalorder %s17, 1
        %s169 = scalar_select %p168, %s17, 1
        %s170 = smul.addr %s169, 8
        %s171 = scalar_lea.vmem %s1, %s170
        %p172 = pneg %p64
        %p173 = pneg %p61
        %p174 = scmp.lt.s32.totalorder %s17, 1
        %s175 = scalar_select %p174, %s17, 1
        %s176 = scalar_lea.vmem %s2, %s175
        %p177 = pneg %p90
        %p178 = pneg %p87
        %p179 = pneg %p116
        %p180 = pneg %p113
        %s181 = sand.u32 %s103, 1
        %s182 = scalar_lea.sflag [#allocation3], %s181
        %s183 = sand.u32 %s103, 1
        %s184 = scalar_lea.vmem [#allocation2], %s183
        %p185 = scmp.lt.s32.totalorder %s17, 1
        %s186 = scalar_select %p185, %s17, 1
        %s187 = smul.addr %s186, 8
        %s188 = scalar_lea.vmem %s0, %s187
        %p189 = scmp.lt.s32.totalorder %s17, 1
        %s190 = scalar_select %p189, %s17, 1
        %s191 = smul.addr %s190, 8
        %s192 = scalar_lea.vmem %s1, %s191
        %p193 = scmp.lt.s32.totalorder %s17, 1
        %s194 = scalar_select %p193, %s17, 1
        %s195 = scalar_lea.vmem %s2, %s194
        %v196 = vld [vmem:[%s195] sm:$0x1]
        %v197 = vld [vmem:[%s192] sm:$0xff]
        %vm198 = vcmp.gt.f32.partialorder %v196, 0.0
        %v199 = vld [vmem:[%s188] sm:$0xff]
        %v200 = vsel %vm198, 1, 0
        %v201 = vperm.slane %v200, 0
        %vm202 = vcmp.eq.s32.totalorder %v201, 1
        %v203 = vsel %vm202, %v199, 0.1
        %v204 = vsub.f32 %v203, 1.0
        %v205 = vmul.f32 %v204, %v204
        %v206 = vmul.f32 %v205, -500000.0
        %v207 = vmul.f32 %v206, 1.442695
        %v208 = vpow.pop %v207
        %v210 = vperm.slane %v196, 0
        %v212 = vmul.f32 %v208, %v210
        %vm213 = vcmask 130048
        %v214 = vsel %vm213, %v212, 0.0
        %215 = vadd.xlane.f32.xlu0 %v214
        %v216 = vpop.xlane.xlu0 %215
        %v217 = vmax.f32 %v216, 1e-10
        %v218 = vlog2.pop %v217
        %v219 = vmul.f32 %v218, 0.6931472
        %v220 = vmul.f32 %v219, %v197
        %vm221 = vcmask 7168
        %v222 = vsel %vm221, %v220, 0.0
        %v223 = vrot.slane %v222, 4
        %v224 = vadd.f32 %v222, %v223
        %v225 = vrot.slane %v224, 2
        %v226 = vadd.f32 %v224, %v225
        %v227 = vrot.slane %v226, 1
        %v228 = vadd.f32 %v226, %v227
        %v229 = vmax.f32 %v203, -4.0
        %v230 = vmin.f32 %v229, 4.0
        %v231 = vsub.f32 %v230, 0.1
        %v232 = vmul.f32 %v231, %v231
        %v233 = vmul.f32 %v232, -50.0
        %v234 = vmul.f32 %v233, 1.442695
        %v235 = vpow.pop %v234
        %v236 = vmul.f32 %v235, %v210
        %v237 = vsel %vm213, %v236, 0.0
        %238 = vadd.xlane.f32.xlu0 %v237
        %v239 = vpop.xlane.xlu0 %238
        %v240 = vmax.f32 %v239, 1e-10
        %v241 = vlog2.pop %v240
        %v242 = vmul.f32 %v241, 0.6931472
        %v243 = vmul.f32 %v242, %v197
        %v244 = vsel %vm221, %v243, 0.0
        %v245 = vrot.slane %v244, 4
        %v246 = vadd.f32 %v244, %v245
        %v247 = vrot.slane %v246, 2
        %v248 = vadd.f32 %v246, %v247
        %v249 = vrot.slane %v248, 1
        %v250 = vadd.f32 %v248, %v249
        %v251 = vmul.f32 %v230, 20.0
        %v252 = vmul.f32 %v251, 1.442695
        %v253 = vpow.pop %v252
        %v254 = vmul.f32 %v236, %v253
        %v255 = vmul.f32 %v254, 0.01831564
        %v256 = vsel %vm213, %v255, 0.0
        %257 = vadd.xlane.f32.xlu0 %v256
        %v258 = vpop.xlane.xlu0 %257
        %v259 = vmax.f32 %v258, 1e-10
        %v260 = vlog2.pop %v259
        %v261 = vmul.f32 %v260, 0.6931472
        %v262 = vmul.f32 %v261, %v197
        %v263 = vsel %vm221, %v262, 0.0
        %v264 = vrot.slane %v263, 4
        %v265 = vadd.f32 %v263, %v264
        %v266 = vrot.slane %v265, 2
        %v267 = vadd.f32 %v265, %v266
        %v268 = vrot.slane %v267, 1
        %v269 = vadd.f32 %v267, %v268
        %v270 = vmul.f32 %v255, %v253
        %v271 = vmul.f32 %v270, 0.00033546262
        %v272 = vsel %vm213, %v271, 0.0
        %273 = vadd.xlane.f32.xlu0 %v272
        %v274 = vpop.xlane.xlu0 %273
        %v275 = vmax.f32 %v274, 1e-10
        %v276 = vlog2.pop %v275
        %v277 = vmul.f32 %v276, 0.6931472
        %v278 = vmul.f32 %v277, %v197
        %v279 = vsel %vm221, %v278, 0.0
        %v280 = vrot.slane %v279, 4
        %v281 = vadd.f32 %v279, %v280
        %v282 = vrot.slane %v281, 2
        %v283 = vadd.f32 %v281, %v282
        %v284 = vrot.slane %v283, 1
        %v285 = vadd.f32 %v283, %v284
        %v286 = vmul.f32 %v271, %v253
        %v287 = vmul.f32 %v286, 6.1442124e-06
        %v288 = vsel %vm213, %v287, 0.0
        %289 = vadd.xlane.f32.xlu0 %v288
        %v290 = vpop.xlane.xlu0 %289
        %v291 = vmax.f32 %v290, 1e-10
        %v292 = vlog2.pop %v291
        %v293 = vmul.f32 %v292, 0.6931472
        %v294 = vmul.f32 %v293, %v197
        %v295 = vsel %vm221, %v294, 0.0
        %v296 = vrot.slane %v295, 4
        %v297 = vadd.f32 %v295, %v296
        %v298 = vrot.slane %v297, 2
        %v299 = vadd.f32 %v297, %v298
        %v300 = vrot.slane %v299, 1
        %v301 = vadd.f32 %v299, %v300
        %v302 = vmul.f32 %v287, %v253
        %v303 = vmul.f32 %v302, 1.12535176e-07
        %v304 = vsel %vm213, %v303, 0.0
        %305 = vadd.xlane.f32.xlu0 %v304
        %v306 = vpop.xlane.xlu0 %305
        %v307 = vmax.f32 %v306, 1e-10
        %v308 = vlog2.pop %v307
        %v309 = vmul.f32 %v308, 0.6931472
        %v310 = vmul.f32 %v309, %v197
        %v311 = vsel %vm221, %v310, 0.0
        %v312 = vrot.slane %v311, 4
        %v313 = vadd.f32 %v311, %v312
        %v314 = vrot.slane %v313, 2
        %v315 = vadd.f32 %v313, %v314
        %v316 = vrot.slane %v315, 1
        %v317 = vadd.f32 %v315, %v316
        %v318 = vmul.f32 %v230, -20.0
        %v319 = vmul.f32 %v318, 1.442695
        %v320 = vpow.pop %v319
        %v321 = vmul.f32 %v236, %v320
        %v322 = vsel %vm213, %v321, 0.0
        %323 = vadd.xlane.f32.xlu0 %v322
        %v324 = vpop.xlane.xlu0 %323
        %v325 = vmax.f32 %v324, 1e-10
        %v326 = vlog2.pop %v325
        %v327 = vmul.f32 %v326, 0.6931472
        %v328 = vmul.f32 %v327, %v197
        %v329 = vsel %vm221, %v328, 0.0
        %v330 = vrot.slane %v329, 4
        %v331 = vadd.f32 %v329, %v330
        %v332 = vrot.slane %v331, 2
        %v333 = vadd.f32 %v331, %v332
        %v334 = vrot.slane %v333, 1
        %v335 = vadd.f32 %v333, %v334
        %v336 = vmul.f32 %v321, %v320
        %v337 = vmul.f32 %v336, 0.01831564
        %v338 = vsel %vm213, %v337, 0.0
        %339 = vadd.xlane.f32.xlu0 %v338
        %v340 = vpop.xlane.xlu0 %339
        %v341 = vmax.f32 %v340, 1e-10
        %v342 = vlog2.pop %v341
        %v343 = vmul.f32 %v342, 0.6931472
        %v344 = vmul.f32 %v343, %v197
        %v345 = vsel %vm221, %v344, 0.0
        %v346 = vrot.slane %v345, 4
        %v347 = vadd.f32 %v345, %v346
        %v348 = vrot.slane %v347, 2
        %v349 = vadd.f32 %v347, %v348
        %v350 = vrot.slane %v349, 1
        %v351 = vadd.f32 %v349, %v350
        %v352 = vmul.f32 %v337, %v320
        %v353 = vmul.f32 %v352, 0.00033546262
        %v354 = vsel %vm213, %v353, 0.0
        %355 = vadd.xlane.f32.xlu0 %v354
        %v356 = vpop.xlane.xlu0 %355
        %v357 = vmax.f32 %v356, 1e-10
        %v358 = vlog2.pop %v357
        %v359 = vmul.f32 %v358, 0.6931472
        %v360 = vmul.f32 %v359, %v197
        %v361 = vsel %vm221, %v360, 0.0
        %v362 = vrot.slane %v361, 4
        %v363 = vadd.f32 %v361, %v362
        %v364 = vrot.slane %v363, 2
        %v365 = vadd.f32 %v363, %v364
        %v366 = vrot.slane %v365, 1
        %v367 = vadd.f32 %v365, %v366
        %v368 = vmul.f32 %v353, %v320
        %v369 = vmul.f32 %v368, 6.1442124e-06
        %v370 = vsel %vm213, %v369, 0.0
        %371 = vadd.xlane.f32.xlu0 %v370
        %v372 = vpop.xlane.xlu0 %371
        %v373 = vmax.f32 %v372, 1e-10
        %v374 = vlog2.pop %v373
        %v375 = vmul.f32 %v374, 0.6931472
        %v376 = vmul.f32 %v375, %v197
        %v377 = vsel %vm221, %v376, 0.0
        %v378 = vrot.slane %v377, 4
        %v379 = vadd.f32 %v377, %v378
        %v380 = vrot.slane %v379, 2
        %v381 = vadd.f32 %v379, %v380
        %v382 = vrot.slane %v381, 1
        %v383 = vadd.f32 %v381, %v382
        %v384 = vmul.f32 %v369, %v320
        %v385 = vmul.f32 %v384, 1.12535176e-07
        %v386 = vsel %vm213, %v385, 0.0
        %387 = vadd.xlane.f32.xlu0 %v386
        %v388 = vpop.xlane.xlu0 %387
        %v389 = vmax.f32 %v388, 1e-10
        %v390 = vlog2.pop %v389
        %v391 = vmul.f32 %v390, 0.6931472
        %v392 = vmul.f32 %v391, %v197
        %v393 = vsel %vm221, %v392, 0.0
        %v394 = vrot.slane %v393, 4
        %v395 = vadd.f32 %v393, %v394
        %v396 = vrot.slane %v395, 2
        %v397 = vadd.f32 %v395, %v396
        %v398 = vrot.slane %v397, 1
        %v399 = vadd.f32 %v397, %v398
        %v400 = vlaneseq
        %v401 = vand.u32 %v400, 127
        %vm402 = vcmp.eq.s32.totalorder %v401, 0
        %404 = vset.pattern.permute.xlu0 0
        %405 = vperm.xlu0 %404, %v228
        %v406 = vpop.permute.xlu0 %405
        %v408 = vsel %vm402, %v406, 0.0
        %v409 = vadd.f32 %v408, 0.0
        %vm410 = vcmp.eq.s32.totalorder %v401, 1
        %412 = vset.pattern.permute.xlu0 0
        %413 = vperm.xlu0 %412, %v317
        %v414 = vpop.permute.xlu0 %413
        %v416 = vsel %vm410, %v414, 0.0
        %v417 = vadd.f32 %v409, %v416
        %vm418 = vcmp.eq.s32.totalorder %v401, 2
        %420 = vset.pattern.permute.xlu0 0
        %421 = vperm.xlu0 %420, %v301
        %v422 = vpop.permute.xlu0 %421
        %v424 = vsel %vm418, %v422, 0.0
        %v425 = vadd.f32 %v417, %v424
        %vm426 = vcmp.eq.s32.totalorder %v401, 3
        %428 = vset.pattern.permute.xlu0 0
        %429 = vperm.xlu0 %428, %v285
        %v430 = vpop.permute.xlu0 %429
        %v432 = vsel %vm426, %v430, 0.0
        %v433 = vadd.f32 %v425, %v432
        %vm434 = vcmp.eq.s32.totalorder %v401, 4
        %436 = vset.pattern.permute.xlu0 0
        %437 = vperm.xlu0 %436, %v269
        %v438 = vpop.permute.xlu0 %437
        %v440 = vsel %vm434, %v438, 0.0
        %v441 = vadd.f32 %v433, %v440
        %vm442 = vcmp.eq.s32.totalorder %v401, 5
        %444 = vset.pattern.permute.xlu0 0
        %445 = vperm.xlu0 %444, %v250
        %v446 = vpop.permute.xlu0 %445
        %v448 = vsel %vm442, %v446, 0.0
        %v449 = vadd.f32 %v441, %v448
        %vm450 = vcmp.eq.s32.totalorder %v401, 6
        %452 = vset.pattern.permute.xlu0 0
        %453 = vperm.xlu0 %452, %v335
        %v454 = vpop.permute.xlu0 %453
        %v456 = vsel %vm450, %v454, 0.0
        %v457 = vadd.f32 %v449, %v456
        %vm458 = vcmp.eq.s32.totalorder %v401, 7
        %460 = vset.pattern.permute.xlu0 0
        %461 = vperm.xlu0 %460, %v351
        %v462 = vpop.permute.xlu0 %461
        %v464 = vsel %vm458, %v462, 0.0
        %v465 = vadd.f32 %v457, %v464
        %vm466 = vcmp.eq.s32.totalorder %v401, 8
        %468 = vset.pattern.permute.xlu0 0
        %469 = vperm.xlu0 %468, %v367
        %v470 = vpop.permute.xlu0 %469
        %v472 = vsel %vm466, %v470, 0.0
        %v473 = vadd.f32 %v465, %v472
        %vm474 = vcmp.eq.s32.totalorder %v401, 9
        %476 = vset.pattern.permute.xlu0 0
        %477 = vperm.xlu0 %476, %v383
        %v478 = vpop.permute.xlu0 %477
        %v480 = vsel %vm474, %v478, 0.0
        %v481 = vadd.f32 %v473, %v480
        %vm482 = vcmp.eq.s32.totalorder %v401, 10
        %484 = vset.pattern.permute.xlu0 0
        %485 = vperm.xlu0 %484, %v399
        %v486 = vpop.permute.xlu0 %485
        %v488 = vsel %vm482, %v486, 0.0
        %v489 = vadd.f32 %v481, %v488
        %490 = vst [vmem:[%s184] sm:$0x1] %v489
        %s491 = sand.u32 %s103, 1
        %s492 = scalar_lea.sflag [#allocation3], %s491
        %s493 = sand.u32 %s103, 1
        %s494 = scalar_lea.vmem [#allocation2], %s493
        // Predicated region
        $region33: #{tpu_custom_call.1} parent=31 // pred_check
          %p495 = pneg %p113
        $region34: #{tpu_custom_call.1} parent=31 // pred_check_branch
          %497 = sbr.rel (%p495) target = $region36
        $region35: #{tpu_custom_call.1} parent=31 // pred_region
          %499 = vsyncadd %s492, 0
          %s500 = scalar_lea.hbm %s3, %s17
          %s502 = sshll.u32 %s494, 4
          %s503 = int_to_ptr.vmem [resolvable:$true] %s502
          %s504 = sshll.u32 %s500, 4
          %s505 = int_to_ptr.hbm [resolvable:$true] %s504
          %507 = dma.vmem_to_hbm [thread:$0]  %s503, 16, %s505, %s492
        $region36: #{tpu_custom_call.1} parent=31 // pred_fallthru
          _
      $region32: #{tpu_custom_call.1} parent=5 // pred_fallthru
        _
      %p508 = scmp.le.s32.totalorder 2, %s12
      // Predicated region
      $region37: #{tpu_custom_call.1} parent=5 // pred_check
        %p509 = pneg %p508
      $region38: #{tpu_custom_call.1} parent=5 // pred_check_branch
        %511 = sbr.rel (%p509) target = $region40
      $region39: #{tpu_custom_call.1} parent=5 // pred_region
        %s512 = ssub.s32 %s12, 2
        // Predicated region
        $region41: #{tpu_custom_call.1} parent=39 // pred_check
          %p513 = pneg %p119
        $region42: #{tpu_custom_call.1} parent=39 // pred_check_branch
          %515 = sbr.rel (%p513) target = $region44
        $region43: #{tpu_custom_call.1} parent=39 // pred_region
          %s516 = sand.u32 %s104, 1
          %s517 = scalar_lea.sflag [#allocation3], %s516
          %s518 = sand.u32 %s104, 1
          %s519 = scalar_lea.vmem [#allocation2], %s518
          %521 = dma.done %s517, 16
        $region44: #{tpu_custom_call.1} parent=39 // pred_fallthru
          _
      $region40: #{tpu_custom_call.1} parent=5 // pred_fallthru
        _
    $region6: #{tpu_custom_call.1} parent=1 // loop_footer
      %s16 = sadd.s32 1, %s12
    $region7: #{tpu_custom_call.1} parent=1 // loop_footer_branch
      %11 = sbr.rel target = $region3
    $region8: #{tpu_custom_call.1} parent=1 // loop_exit
      _
    %522 = vsyncpa [#allocation3], 1
    %s523 = scalar_lea.sflag [#allocation3], 1
    %524 = vsyncpa %s523, 1

</llo_original>
